<compile_context>
chip_gen: v6e
topology: v6e:2x2x1
jax: 0.10.0
libtpu: 0.0.40
codegen_flags: <defaults>
</compile_context>

<pallas_src>
import jax
import jax.numpy as jnp
from jax.experimental import pallas as pl
from jax.experimental.pallas import tpu as pltpu


def _make_mbstat_kernel(inv_f):
    """Builds the kernel; inv_f = 1 / (C*H*W) baked in as a Python float."""

    def kernel(x_ref, ox_ref, ostat_ref, acc_ref):
        # x_ref:    (N, TF)   input feature tile
        # ox_ref:   (N, TF)   pass-through copy of the tile
        # ostat_ref:(N, HW)   minibatch-stat slab (written once, last step)
        # acc_ref:  (1, 1)    running sum of per-feature std (VMEM scratch)
        i = pl.program_id(0)

        @pl.when(i == 0)
        def _init():
            acc_ref[...] = jnp.zeros_like(acc_ref)

        # Direct lane-dense pass-through copy (no compute dependency).
        ox_ref[...] = x_ref[...]

        # Two-pass batch statistics (matches reference numerics; the kernel is
        # HBM-bound so the extra VALU work is hidden under the stream).
        xf = x_ref[...].astype(jnp.float32)
        mu = jnp.mean(xf, axis=0, keepdims=True)              # (1, TF)
        d = xf - mu
        var = jnp.mean(d * d, axis=0, keepdims=True)          # (1, TF)
        std = jnp.sqrt(var + 1e-8)                            # (1, TF)
        acc_ref[...] += jnp.sum(std, axis=1, keepdims=True)   # (1, 1)

        @pl.when(i == pl.num_programs(0) - 1)
        def _finalize():
            stat = acc_ref[...] * inv_f                       # (1, 1)
            ostat_ref[...] = jnp.broadcast_to(
                stat, ostat_ref.shape).astype(ostat_ref.dtype)

    return kernel


def _pick_feature_tile(f_total, n_rows, itemsize, tf_target):
    """Largest multiple of 128 dividing f_total, capped by tf_target and a
    per-buffer VMEM budget; full extent when f_total is not 128-aligned."""
    if f_total % 128 != 0:
        return f_total
    # Keep one (n_rows, tf) buffer <= ~2 MiB so double-buffered in/out tiles
    # stay far below the 16/32 MiB scoped VMEM limits on v5e/v6e/v7x.
    budget = max(128, ((2 << 20) // max(1, n_rows * itemsize)) // 128 * 128)
    cap = min(tf_target, budget, f_total)
    best = 128
    t = 128
    while t <= cap:
        if f_total % t == 0:
            best = t
        t += 128
    return best


def minibatch_stat_concat(x, *, tf_target=2048):
    """x: (N, C, H, W) float -> (N, C+1, H, W)."""
    n, c, h, w = x.shape
    hw = h * w
    f = c * hw
    itemsize = jnp.dtype(x.dtype).itemsize
    tf = _pick_feature_tile(f, n, itemsize, tf_target)
    num_tiles = f // tf

    kernel = _make_mbstat_kernel(1.0 / float(f))

    out_x, out_stat = pl.pallas_call(
        kernel,
        out_shape=(jax.ShapeDtypeStruct((n, f), x.dtype),
                   jax.ShapeDtypeStruct((n, hw), x.dtype)),
        grid_spec=pltpu.PrefetchScalarGridSpec(
            num_scalar_prefetch=0,
            grid=(num_tiles,),
            in_specs=[pl.BlockSpec((n, tf), lambda i: (0, i))],
            out_specs=[pl.BlockSpec((n, tf), lambda i: (0, i)),
                       pl.BlockSpec((n, hw), lambda i: (0, 0))],
            scratch_shapes=[pltpu.VMEM((1, 1), jnp.float32)]),
        compiler_params=pltpu.CompilerParams(
            dimension_semantics=("arbitrary",),
            vmem_limit_bytes=32 * 1024 * 1024),
        cost_estimate=pl.CostEstimate(
            flops=6 * n * f,
            transcendentals=f,
            bytes_accessed=(2 * n * f + n * hw) * itemsize),
    )(x.reshape(n, f))

    return jnp.concatenate(
        [out_x.reshape(n, c, h, w), out_stat.reshape(n, 1, h, w)], axis=1)


def _reference(x):
    mu = jnp.mean(x, axis=0, keepdims=True)
    std = jnp.sqrt(jnp.mean((x - mu) ** 2, axis=0, keepdims=True) + 1e-8)
    stat = jnp.mean(std)
    n, c, h, w = x.shape
    vals = jnp.broadcast_to(stat, (n, 1, h, w))
    return jnp.concatenate([x, vals], axis=1)


if __name__ == "__main__":
    key = jax.random.PRNGKey(0)

    # Small shape consistent with the module: batch=2, channels=4, spatial=16.
    N, C, H, W = 2, 4, 16, 16
    x = jax.random.normal(key, (N, C, H, W), dtype=jnp.float32)
    ref = _reference(x)

    # Multi-tile path: F = 1024, TF = 512 -> grid of 2 (exercises accumulator).
    out = jax.block_until_ready(minibatch_stat_concat(x, tf_target=512))
    assert out.shape == (N, C + 1, H, W), out.shape
    assert jnp.allclose(out, ref, atol=1e-5, rtol=1e-5), \
        float(jnp.max(jnp.abs(out - ref)))

    # Default tile target (single grid step here).
    out2 = jax.block_until_ready(minibatch_stat_concat(x))
    assert jnp.allclose(out2, ref, atol=1e-5, rtol=1e-5)

    # Non-128-aligned fallback (full-extent feature block).
    x_odd = jax.random.normal(jax.random.PRNGKey(1), (3, 3, 5, 5),
                              dtype=jnp.float32)
    out3 = jax.block_until_ready(minibatch_stat_concat(x_odd))
    assert jnp.allclose(out3, _reference(x_odd), atol=1e-5, rtol=1e-5)

    print("KERNEL_OK")
</pallas_src>

<mosaic_0001>
module attributes {stable_mosaic.version = 11 : i64} {
  func.func @kernel(%arg0: i32, %arg1: memref<2x512xf32, #tpu.memory_space<vmem>>, %arg2: memref<2x512xf32, #tpu.memory_space<vmem>>, %arg3: memref<2x256xf32, #tpu.memory_space<vmem>>, %arg4: memref<1x1xf32, #tpu.memory_space<vmem>>) attributes {dimension_semantics = [#tpu.dimension_semantics<arbitrary>], iteration_bounds = array<i64: 2>, scalar_prefetch = 0 : i64, scratch_operands = 1 : i64, tpu.core_type = #tpu.core_type<tc>, window_params = [{transform_indices = @transform_0, window_bounds = array<i64: 2, 512>}, {transform_indices = @transform_1, window_bounds = array<i64: 2, 512>}, {pipeline_mode = #tpu.pipeline_mode<synchronous>, transform_indices = @transform_2, window_bounds = array<i64: 2, 256>}]} {
    %c0_i32 = arith.constant 0 : i32
    %0 = arith.cmpi eq, %arg0, %c0_i32 : i32
    %1 = arith.extui %0 : i1 to i32
    %c0_i32_0 = arith.constant 0 : i32
    %2 = arith.cmpi ne, %1, %c0_i32_0 : i32
    scf.if %2 {
      %cst_16 = arith.constant 0.000000e+00 : f32
      %28 = vector.broadcast %cst_16 : f32 to vector<1x1xf32>
      %c0_17 = arith.constant 0 : index
      %c0_18 = arith.constant 0 : index
      %29 = vector.load %arg4[%c0_17, %c0_18] : memref<1x1xf32, #tpu.memory_space<vmem>>, vector<1x1xf32>
      tpu.vector_store %arg4[%c0_17, %c0_18], %28 {strides = array<i32>} : memref<1x1xf32, #tpu.memory_space<vmem>>, vector<1x1xf32>,
    } else {
    }
    %c0 = arith.constant 0 : index
    %c0_1 = arith.constant 0 : index
    %3 = vector.load %arg1[%c0, %c0_1] : memref<2x512xf32, #tpu.memory_space<vmem>>, vector<2x512xf32>
    %c0_2 = arith.constant 0 : index
    %c0_3 = arith.constant 0 : index
    %4 = vector.load %arg2[%c0_2, %c0_3] : memref<2x512xf32, #tpu.memory_space<vmem>>, vector<2x512xf32>
    tpu.vector_store %arg2[%c0_2, %c0_3], %3 {strides = array<i32>} : memref<2x512xf32, #tpu.memory_space<vmem>>, vector<2x512xf32>,
    %c0_4 = arith.constant 0 : index
    %c0_5 = arith.constant 0 : index
    %5 = vector.load %arg1[%c0_4, %c0_5] : memref<2x512xf32, #tpu.memory_space<vmem>>, vector<2x512xf32>
    %cst = arith.constant dense<0.000000e+00> : vector<512xf32>
    %6 = vector.multi_reduction <add>, %5, %cst [0] : vector<2x512xf32> to vector<512xf32>
    %7 = vector.shape_cast %6 : vector<512xf32> to vector<1x512xf32>
    %cst_6 = arith.constant 2.000000e+00 : f32
    %8 = vector.broadcast %cst_6 : f32 to vector<1x512xf32>
    %9 = arith.divf %7, %8 : vector<1x512xf32>
    %10 = vector.broadcast %9 : vector<1x512xf32> to vector<2x512xf32>
    %11 = arith.subf %5, %10 : vector<2x512xf32>
    %12 = arith.mulf %11, %11 : vector<2x512xf32>
    %cst_7 = arith.constant dense<0.000000e+00> : vector<512xf32>
    %13 = vector.multi_reduction <add>, %12, %cst_7 [0] : vector<2x512xf32> to vector<512xf32>
    %14 = vector.shape_cast %13 : vector<512xf32> to vector<1x512xf32>
    %cst_8 = arith.constant 2.000000e+00 : f32
    %15 = vector.broadcast %cst_8 : f32 to vector<1x512xf32>
    %16 = arith.divf %14, %15 : vector<1x512xf32>
    %cst_9 = arith.constant 9.99999993E-9 : f32
    %17 = vector.broadcast %cst_9 : f32 to vector<1x512xf32>
    %18 = arith.addf %16, %17 : vector<1x512xf32>
    %19 = math.sqrt %18 : vector<1x512xf32>
    %c0_10 = arith.constant 0 : index
    %c0_11 = arith.constant 0 : index
    %20 = vector.load %arg4[%c0_10, %c0_11] : memref<1x1xf32, #tpu.memory_space<vmem>>, vector<1x1xf32>
    %cst_12 = arith.constant dense<0.000000e+00> : vector<1xf32>
    %21 = vector.multi_reduction <add>, %19, %cst_12 [1] : vector<1x512xf32> to vector<1xf32>
    %22 = vector.shape_cast %21 : vector<1xf32> to vector<1x1xf32>
    %23 = arith.addf %20, %22 : vector<1x1xf32>
    %c0_13 = arith.constant 0 : index
    %c0_14 = arith.constant 0 : index
    %24 = vector.load %arg4[%c0_13, %c0_14] : memref<1x1xf32, #tpu.memory_space<vmem>>, vector<1x1xf32>
    tpu.vector_store %arg4[%c0_13, %c0_14], %23 {strides = array<i32>} : memref<1x1xf32, #tpu.memory_space<vmem>>, vector<1x1xf32>,
    %c1_i32 = arith.constant 1 : i32
    %25 = arith.cmpi eq, %arg0, %c1_i32 : i32
    %26 = arith.extui %25 : i1 to i32
    %c0_i32_15 = arith.constant 0 : i32
    %27 = arith.cmpi ne, %26, %c0_i32_15 : i32
    scf.if %27 {
      %c0_16 = arith.constant 0 : index
      %c0_17 = arith.constant 0 : index
      %28 = vector.load %arg4[%c0_16, %c0_17] : memref<1x1xf32, #tpu.memory_space<vmem>>, vector<1x1xf32>
      %cst_18 = arith.constant 9.765625E-4 : f32
      %29 = vector.broadcast %cst_18 : f32 to vector<1x1xf32>
      %30 = arith.mulf %28, %29 : vector<1x1xf32>
      %31 = vector.shape_cast %30 : vector<1x1xf32> to vector<1x1xf32>
      %32 = vector.broadcast %31 : vector<1x1xf32> to vector<2x256xf32>
      %c0_19 = arith.constant 0 : index
      %c0_20 = arith.constant 0 : index
      %33 = vector.load %arg3[%c0_19, %c0_20] : memref<2x256xf32, #tpu.memory_space<vmem>>, vector<2x256xf32>
      tpu.vector_store %arg3[%c0_19, %c0_20], %32 {strides = array<i32>} : memref<2x256xf32, #tpu.memory_space<vmem>>, vector<2x256xf32>,
    } else {
    }
    return
  }
  func.func @transform_0(%arg0: i32) -> (i32, i32) {
    %c0_i32 = arith.constant 0 : i32
    %c0_i32_0 = arith.constant 0 : i32
    return %c0_i32, %arg0 : i32, i32
  }
  func.func @transform_1(%arg0: i32) -> (i32, i32) {
    %c0_i32 = arith.constant 0 : i32
    %c0_i32_0 = arith.constant 0 : i32
    return %c0_i32, %arg0 : i32, i32
  }
  func.func @transform_2(%arg0: i32) -> (i32, i32) {
    %c0_i32 = arith.constant 0 : i32
    %c0_i32_0 = arith.constant 0 : i32
    %c0_i32_1 = arith.constant 0 : i32
    return %c0_i32, %c0_i32_0 : i32, i32
  }
}

</mosaic_0001>

<llo_original>
// kernel: tpu_custom_call.1
$region0: #{tpu_custom_call.1}
  #allocation0 [shape = 'u32[]', space=smem, size = 0x4, offset = 0x4, fixed_abs, tag = 'smem constant byte address 0x4 - core index']
  #allocation1 [shape = 'u32[144,128]{1,0:T(1,128)}', space=vmem, size = 0x12000, scoped, tag = 'internal scratch']
  #allocation2 [shape = 'f32[1,1]{1,0:T(1,128)}', space=vmem, size = 0x200, scoped, tag = 'scratch operand']
  %s0 = inlined_call_operand.hbm [shape: f32[2,1024], index: 0, kind: input, shape index: {}]
  %s1 = inlined_call_operand.hbm [shape: f32[2,1024], index: 1, kind: output, shape index: {0}]
  %s2 = inlined_call_operand.hbm [shape: f32[2,256], index: 2, kind: output, shape index: {1}]
  %3 = xla_tuple %s1, %s2
  %s4 = sld [smem:[#allocation0]]
  $region57: #{tpu_custom_call.1} parent=0
    _
  %s6 = ssub.s32 1, %s4
  %s7 = scalar_select 0, %s6, %s4
  $region1: #{tpu_custom_call.1} parent=0
    #allocation3 [shape = 'u8[8192]{0}', space=vmem, size = 0x2000, scoped, tag = 'input window, operand 0']
    #allocation4 [shape = 's32[2]{0}', space=sflag, size = 0x8, scoped, tag = 'scoped memory for tpu_custom_call.1']
    #allocation5 [shape = 's32[2]{0}', space=sflag, size = 0x8, scoped, tag = 'scoped memory for tpu_custom_call.1']
    #allocation6 [shape = 'u8[8192]{0}', space=vmem, size = 0x2000, scoped, tag = 'output window, operand 0']
    #allocation7 [shape = 'u8[2048]{0}', space=vmem, size = 0x800, scoped, tag = 'output window, operand 1, single buffered']
    #allocation8 [shape = 's32[1]{0}', space=sflag, size = 0x4, scoped, tag = 'scoped memory for tpu_custom_call.1']
    %8 = vsyncpa [#allocation4], 0
    %s9 = scalar_lea.sflag [#allocation4], 1
    %10 = vsyncpa %s9, 0
    %11 = vsyncpa [#allocation5], 0
    %s12 = scalar_lea.sflag [#allocation5], 1
    %13 = vsyncpa %s12, 0
    %14 = vsyncpa [#allocation8], 0
    loop: start=0, step=1, limit=4
    $region2: #{tpu_custom_call.1} parent=1 // loop_pre_header
      _
    $region3: #{tpu_custom_call.1} parent=1 // loop_header
      %s16 = sphi 0, %s20
      %p17 = scmp.ge.s32.totalorder %s16, 4
      %s26 = sphi 0, %s28
      %s29 = sphi 0, %s26
      %s30 = sphi 0, %s29
      %s46 = sphi 0, %s30
      %s52 = sphi 0, %s54
      %s55 = sphi 0, %s52
      %s56 = sphi 0, %s55
      %s72 = sphi 0, %s56
      %s76 = sphi 0, %s76
      %s78 = sphi 0, %s76
      %s79 = sphi 0, %s78
      %s93 = sphi 0, %s79
    $region4: #{tpu_custom_call.1} parent=1 // loop_header_branch
      %19 = sbr.rel (%p17) target = $region8
    $region5: #{tpu_custom_call.1} parent=1 // loop_body
      %s21 = ssub.s32 %s16, 1
      %s22 = ssub.s32 %s16, 2
      %s23 = sadd.s32 %s16, 1
      %s24 = ssub.s32 %s16, %s23
      %p25 = scmp.eq.s32.totalorder %s24, 0
      %s27 = sadd.s32 %s26, 1
      %s28 = scalar_select %p25, %s26, %s27
      %p31 = pneg %p25
      %p32 = scmp.eq.s32.totalorder %s16, 1
      %p33 = por %p31, %p32
      %p34 = scmp.ne.s32.totalorder %s26, %s29
      %p35 = scmp.eq.s32.totalorder %s16, 0
      %p36 = por %p34, %p35
      %p37 = scmp.ne.s32.totalorder %s26, %s29
      %p38 = scmp.eq.s32.totalorder %s21, 1
      %p39 = por %p37, %p38
      %p40 = scmp.ne.s32.totalorder %s29, %s30
      %p41 = scmp.eq.s32.totalorder %s21, 0
      %p42 = por %p40, %p41
      %p43 = scmp.ne.s32.totalorder %s29, %s30
      %p44 = scmp.eq.s32.totalorder %s22, 1
      %p45 = por %p43, %p44
      %p47 = scmp.ne.s32.totalorder %s30, %s46
      %p48 = scmp.eq.s32.totalorder %s22, 0
      %p49 = por %p47, %p48
      %s50 = ssub.s32 %s16, %s23
      %p51 = scmp.eq.s32.totalorder %s50, 0
      %s53 = sadd.s32 %s52, 1
      %s54 = scalar_select %p51, %s52, %s53
      %p57 = pneg %p51
      %p58 = scmp.eq.s32.totalorder %s16, 1
      %p59 = por %p57, %p58
      %p60 = scmp.ne.s32.totalorder %s52, %s55
      %p61 = scmp.eq.s32.totalorder %s16, 0
      %p62 = por %p60, %p61
      %p63 = scmp.ne.s32.totalorder %s52, %s55
      %p64 = scmp.eq.s32.totalorder %s21, 1
      %p65 = por %p63, %p64
      %p66 = scmp.ne.s32.totalorder %s55, %s56
      %p67 = scmp.eq.s32.totalorder %s21, 0
      %p68 = por %p66, %p67
      %p69 = scmp.ne.s32.totalorder %s55, %s56
      %p70 = scmp.eq.s32.totalorder %s22, 1
      %p71 = por %p69, %p70
      %p73 = scmp.ne.s32.totalorder %s56, %s72
      %p74 = scmp.eq.s32.totalorder %s22, 0
      %p75 = por %p73, %p74
      %s77 = sadd.s32 %s76, 1
      %p80 = scmp.eq.s32.totalorder %s16, 1
      %p81 = scmp.ne.s32.totalorder %s76, %s78
      %p82 = scmp.eq.s32.totalorder %s16, 0
      %p83 = por %p81, %p82
      %p84 = scmp.ne.s32.totalorder %s76, %s78
      %p85 = scmp.eq.s32.totalorder %s21, 1
      %p86 = por %p84, %p85
      %p87 = scmp.ne.s32.totalorder %s78, %s79
      %p88 = scmp.eq.s32.totalorder %s21, 0
      %p89 = por %p87, %p88
      %p90 = scmp.ne.s32.totalorder %s78, %s79
      %p91 = scmp.eq.s32.totalorder %s22, 1
      %p92 = por %p90, %p91
      %p94 = scmp.ne.s32.totalorder %s79, %s93
      %p95 = scmp.eq.s32.totalorder %s22, 0
      %p96 = por %p94, %p95
      %p97 = scmp.le.s32.totalorder 1, %s16
      %p98 = scmp.lt.s32.totalorder %s16, 3
      %p99 = pnand %p97, %p98
      %p100 = pneg %p99
      // Predicated region
      $region9: #{tpu_custom_call.1} parent=5 // pred_check
        _
      $region10: #{tpu_custom_call.1} parent=5 // pred_check_branch
        %102 = sbr.rel (%p99) target = $region12
      $region11: #{tpu_custom_call.1} parent=5 // pred_region
        %s103 = ssub.s32 %s16, 1
      $region12: #{tpu_custom_call.1} parent=5 // pred_fallthru
        _
      %p104 = scmp.lt.s32.totalorder %s16, 2
      // Predicated region
      $region13: #{tpu_custom_call.1} parent=5 // pred_check
        %p105 = pneg %p104
      $region14: #{tpu_custom_call.1} parent=5 // pred_check_branch
        %107 = sbr.rel (%p105) target = $region16
      $region15: #{tpu_custom_call.1} parent=5 // pred_region
        // Predicated region
        $region17: #{tpu_custom_call.1} parent=15 // pred_check
          %p108 = pneg %p36
        $region18: #{tpu_custom_call.1} parent=15 // pred_check_branch
          %110 = sbr.rel (%p108) target = $region20
        $region19: #{tpu_custom_call.1} parent=15 // pred_region
          %s111 = sand.u32 %s26, 1
          %s112 = scalar_lea.sflag [#allocation4], %s111
          %s113 = sand.u32 %s26, 1
          %s114 = smul.addr %s113, 8
          %s115 = scalar_lea.vmem [#allocation3], %s114
          %s116 = smul.u32 4, %s16
          %s118 = ssub.s32 128, 128
          %119 = vsyncadd %s112, %s118
          %s120 = smul.addr %s116, 32
          %s121 = scalar_lea.hbm %s0, %s120
          %s123 = sshll.u32 %s115, 4
          %s124 = int_to_ptr.vmem [resolvable:$true] %s123
          %126 = dma.hbm_to_vmem [thread:$0]  %s121, 128, %s124, %s112
        $region20: #{tpu_custom_call.1} parent=15 // pred_fallthru
          _
      $region16: #{tpu_custom_call.1} parent=5 // pred_fallthru
        _
      %p127 = scmp.le.s32.totalorder 1, %s16
      %p128 = scmp.lt.s32.totalorder %s16, 3
      %p129 = pnand %p127, %p128
      %p130 = pneg %p129
      // Predicated region
      $region21: #{tpu_custom_call.1} parent=5 // pred_check
        _
      $region22: #{tpu_custom_call.1} parent=5 // pred_check_branch
        %132 = sbr.rel (%p129) target = $region24
      $region23: #{tpu_custom_call.1} parent=5 // pred_region
        %s133 = ssub.s32 %s16, 1
        %s134 = sand.u32 %s29, 1
        %s135 = scalar_lea.sflag [#allocation4], %s134
        %s136 = sand.u32 %s29, 1
        %s137 = smul.addr %s136, 8
        %s138 = scalar_lea.vmem [#allocation3], %s137
        // Predicated region
        $region25: #{tpu_custom_call.1} parent=23 // pred_check
          %p139 = pneg %p42
        $region26: #{tpu_custom_call.1} parent=23 // pred_check_branch
          %141 = sbr.rel (%p139) target = $region28
        $region27: #{tpu_custom_call.1} parent=23 // pred_region
          %142 = dma.done %s135, 128
        $region28: #{tpu_custom_call.1} parent=23 // pred_fallthru
          _
        %s143 = sand.u32 %s29, 1
        %s144 = scalar_lea.sflag [#allocation4], %s143
        %s145 = sand.u32 %s29, 1
        %s146 = smul.addr %s145, 8
        %s147 = scalar_lea.vmem [#allocation3], %s146
        %p148 = pneg %p42
        %p149 = pneg %p39
        %p150 = pneg %p68
        %p151 = pneg %p65
        %s152 = sand.u32 %s55, 1
        %s153 = scalar_lea.sflag [#allocation5], %s152
        %s154 = sand.u32 %s55, 1
        %s155 = smul.addr %s154, 8
        %s156 = scalar_lea.vmem [#allocation6], %s155
        %p157 = pneg %p89
        %p158 = pneg %p86
        %s159 = smul.u32 4, %s21
        %s160 = smul.u32 4, %s21
        %p161 = scmp.eq.s32.totalorder %s21, 0
        // Predicated region
        $region29: #{tpu_custom_call.1} parent=23 // pred_check
          %p162 = pneg %p161
        $region30: #{tpu_custom_call.1} parent=23 // pred_check_branch
          %164 = sbr.rel (%p162) target = $region32
        $region31: #{tpu_custom_call.1} parent=23 // pred_region
          %vm165 = vcmask 0
          %166 = vst.msk [vmem:[#allocation2] sm:$0x1] %vm165, 0.0
        $region32: #{tpu_custom_call.1} parent=23 // pred_fallthru
          _
        %v167 = vld [vmem:[%s138] sm:$0xff]
        %168 = vst [vmem:[%s156] sm:$0xff] %v167
        %v169 = vld [vmem:[%s138] sm:$0xff]
        %v171 = vcombine.high %v169, %v169
        %v173 = vunpack.c.l.s4 1983009808
        %v174 = vunpack.c.0.s8 %v173
        %v175 = vlaneseq
        %v176 = vshrl.u32 %v175, 7
        %v177 = vsub.s32 %v174, %v176
        %v178 = vrot.slane %v169, %v177
        %v180 = vunpack.c.l.s4 1983009808
        %v181 = vunpack.c.0.s8 %v180
        %v182 = vlaneseq
        %v183 = vshrl.u32 %v182, 7
        %v184 = vsub.s32 %v181, %v183
        %v185 = vrot.slane %v171, %v184
        %v186 = vcombine.high %v178, %v178
        %v187 = vcombine.high %v185, %v185
        %vm192 = vcmask 1041408
        %v193 = vsel %vm192, %v178, 0.0
        %v194 = vrot.slane %v193, 4
        %v195 = vadd.f32 %v193, %v194
        %v196 = vrot.slane %v195, 2
        %v197 = vadd.f32 %v195, %v196
        %v198 = vrot.slane %v197, 1
        %v199 = vadd.f32 %v197, %v198
        %v200 = vsel %vm192, %v186, 0.0
        %v201 = vrot.slane %v200, 4
        %v202 = vadd.f32 %v200, %v201
        %v203 = vrot.slane %v202, 2
        %v204 = vadd.f32 %v202, %v203
        %v205 = vrot.slane %v204, 1
        %v206 = vadd.f32 %v204, %v205
        %v207 = vsel %vm192, %v185, 0.0
        %v208 = vrot.slane %v207, 4
        %v209 = vadd.f32 %v207, %v208
        %v210 = vrot.slane %v209, 2
        %v211 = vadd.f32 %v209, %v210
        %v212 = vrot.slane %v211, 1
        %v213 = vadd.f32 %v211, %v212
        %v214 = vsel %vm192, %v187, 0.0
        %v215 = vrot.slane %v214, 4
        %v216 = vadd.f32 %v214, %v215
        %v217 = vrot.slane %v216, 2
        %v218 = vadd.f32 %v216, %v217
        %v219 = vrot.slane %v218, 1
        %v220 = vadd.f32 %v218, %v219
        %v221 = vrcp.pop 2.0
        %v222 = vmul.f32 %v199, %v221
        %v223 = vmul.f32 %v206, %v221
        %v224 = vmul.f32 %v213, %v221
        %v225 = vmul.f32 %v220, %v221
        %v230 = vcombine.low %v222, %v223
        %v231 = vcombine.low %v224, %v225
        %v233 = vunpack.c.l.s4 1983009808
        %v234 = vunpack.c.0.s8 %v233
        %v235 = vlaneseq
        %v236 = vshrl.u32 %v235, 7
        %v237 = vsub.s32 %v234, %v236
        %v238 = vrot.slane %v230, %v237
        %v240 = vunpack.c.l.s4 1983009808
        %v241 = vunpack.c.0.s8 %v240
        %v242 = vlaneseq
        %v243 = vshrl.u32 %v242, 7
        %v244 = vsub.s32 %v241, %v243
        %v245 = vrot.slane %v231, %v244
        %v246 = vcombine.low %v238, %v245
        %v248 = vsub.f32 %v169, %v246
        %v249 = vmul.f32 %v248, %v248
        %v251 = vcombine.high %v249, %v249
        %v253 = vunpack.c.l.s4 1983009808
        %v254 = vunpack.c.0.s8 %v253
        %v255 = vlaneseq
        %v256 = vshrl.u32 %v255, 7
        %v257 = vsub.s32 %v254, %v256
        %v258 = vrot.slane %v249, %v257
        %v260 = vunpack.c.l.s4 1983009808
        %v261 = vunpack.c.0.s8 %v260
        %v262 = vlaneseq
        %v263 = vshrl.u32 %v262, 7
        %v264 = vsub.s32 %v261, %v263
        %v265 = vrot.slane %v251, %v264
        %v266 = vcombine.high %v258, %v258
        %v267 = vcombine.high %v265, %v265
        %v272 = vsel %vm192, %v258, 0.0
        %v273 = vrot.slane %v272, 4
        %v274 = vadd.f32 %v272, %v273
        %v275 = vrot.slane %v274, 2
        %v276 = vadd.f32 %v274, %v275
        %v277 = vrot.slane %v276, 1
        %v278 = vadd.f32 %v276, %v277
        %v279 = vsel %vm192, %v266, 0.0
        %v280 = vrot.slane %v279, 4
        %v281 = vadd.f32 %v279, %v280
        %v282 = vrot.slane %v281, 2
        %v283 = vadd.f32 %v281, %v282
        %v284 = vrot.slane %v283, 1
        %v285 = vadd.f32 %v283, %v284
        %v286 = vsel %vm192, %v265, 0.0
        %v287 = vrot.slane %v286, 4
        %v288 = vadd.f32 %v286, %v287
        %v289 = vrot.slane %v288, 2
        %v290 = vadd.f32 %v288, %v289
        %v291 = vrot.slane %v290, 1
        %v292 = vadd.f32 %v290, %v291
        %v293 = vsel %vm192, %v267, 0.0
        %v294 = vrot.slane %v293, 4
        %v295 = vadd.f32 %v293, %v294
        %v296 = vrot.slane %v295, 2
        %v297 = vadd.f32 %v295, %v296
        %v298 = vrot.slane %v297, 1
        %v299 = vadd.f32 %v297, %v298
        %v300 = vmul.f32 %v278, %v221
        %v301 = vmul.f32 %v285, %v221
        %v302 = vmul.f32 %v292, %v221
        %v303 = vmul.f32 %v299, %v221
        %v304 = vadd.f32 %v300, 1e-08
        %v305 = vadd.f32 %v301, 1e-08
        %v306 = vadd.f32 %v302, 1e-08
        %v307 = vadd.f32 %v303, 1e-08
        %v308 = vrsqrt.pop %v304
        %v309 = vmul.f32 %v304, %v308
        %vm310 = vcmp.eq.f32.partialorder %v304, inf
        %v311 = vsel %vm310, %v304, %v309
        %vm312 = vcmp.eq.f32.partialorder %v304, 0.0
        %v313 = vand.u32 %v304, 2147483648
        %v314 = vsel %vm312, %v313, %v311
        %v315 = vrsqrt.pop %v305
        %v316 = vmul.f32 %v305, %v315
        %vm317 = vcmp.eq.f32.partialorder %v305, inf
        %v318 = vsel %vm317, %v305, %v316
        %vm319 = vcmp.eq.f32.partialorder %v305, 0.0
        %v320 = vand.u32 %v305, 2147483648
        %v321 = vsel %vm319, %v320, %v318
        %v322 = vrsqrt.pop %v306
        %v323 = vmul.f32 %v306, %v322
        %vm324 = vcmp.eq.f32.partialorder %v306, inf
        %v325 = vsel %vm324, %v306, %v323
        %vm326 = vcmp.eq.f32.partialorder %v306, 0.0
        %v327 = vand.u32 %v306, 2147483648
        %v328 = vsel %vm326, %v327, %v325
        %v329 = vrsqrt.pop %v307
        %v330 = vmul.f32 %v307, %v329
        %vm331 = vcmp.eq.f32.partialorder %v307, inf
        %v332 = vsel %vm331, %v307, %v330
        %vm333 = vcmp.eq.f32.partialorder %v307, 0.0
        %v334 = vand.u32 %v307, 2147483648
        %v335 = vsel %vm333, %v334, %v332
        %v336 = vld [vmem:[#allocation2] sm:$0x1]
        %v337 = vadd.f32 %v314, %v321
        %v338 = vadd.f32 %v337, %v328
        %v339 = vadd.f32 %v338, %v335
        %340 = vadd.xlane.f32.xlu0 %v339
        %v341 = vpop.xlane.xlu0 %340
        %v342 = vadd.f32 %v336, %v341
        %vm343 = vcmask 0
        %344 = vst.msk [vmem:[#allocation2] sm:$0x1] %vm343, %v342
        %p345 = scmp.eq.s32.totalorder %s21, 1
        // Predicated region
        $region33: #{tpu_custom_call.1} parent=23 // pred_check
          %p346 = pneg %p345
        $region34: #{tpu_custom_call.1} parent=23 // pred_check_branch
          %348 = sbr.rel (%p346) target = $region36
        $region35: #{tpu_custom_call.1} parent=23 // pred_region
          %v349 = vld [vmem:[#allocation2] sm:$0x1]
          %v350 = vmul.f32 %v349, 0.0009765625
          %v352 = vlaneseq
          %v353 = vshrl.u32 %v352, 7
          %v354 = vsub.s32 0, %v353
          %v355 = vrot.slane %v350, %v354
          %356 = vset.pattern.permute.xlu0 0
          %357 = vperm.xlu0 %356, %v355
          %v358 = vpop.permute.xlu0 %357
          %360 = vst [vmem:[#allocation7] sm:$0xf] %v358
        $region36: #{tpu_custom_call.1} parent=23 // pred_fallthru
          _
        %s361 = sand.u32 %s55, 1
        %s362 = scalar_lea.sflag [#allocation5], %s361
        %s363 = sand.u32 %s55, 1
        %s364 = smul.addr %s363, 8
        %s365 = scalar_lea.vmem [#allocation6], %s364
        // Predicated region
        $region37: #{tpu_custom_call.1} parent=23 // pred_check
          %p366 = pneg %p65
        $region38: #{tpu_custom_call.1} parent=23 // pred_check_branch
          %368 = sbr.rel (%p366) target = $region40
        $region39: #{tpu_custom_call.1} parent=23 // pred_region
          %s369 = smul.u32 4, %s21
          %s371 = ssub.s32 128, 128
          %372 = vsyncadd %s362, %s371
          %s373 = smul.addr %s369, 32
          %s374 = scalar_lea.hbm %s1, %s373
          %s376 = sshll.u32 %s365, 4
          %s377 = int_to_ptr.vmem [resolvable:$true] %s376
          %379 = dma.vmem_to_hbm [thread:$0]  %s377, 128, %s374, %s362
        $region40: #{tpu_custom_call.1} parent=23 // pred_fallthru
          _
        // Predicated region
        $region41: #{tpu_custom_call.1} parent=23 // pred_check
          %p380 = pneg %p86
        $region42: #{tpu_custom_call.1} parent=23 // pred_check_branch
          %382 = sbr.rel (%p380) target = $region44
        $region43: #{tpu_custom_call.1} parent=23 // pred_region
          %s384 = ssub.s32 64, 64
          %385 = vsyncadd [#allocation8], %s384
          %s387 = sshll.u32 [#allocation7], 4
          %s388 = int_to_ptr.vmem [resolvable:$true] %s387
          %390 = dma.vmem_to_hbm [thread:$0]  %s388, 64, %s2, [#allocation8]
        $region44: #{tpu_custom_call.1} parent=23 // pred_fallthru
          _
        // Predicated region
        $region45: #{tpu_custom_call.1} parent=23 // pred_check
          %p391 = pneg %p86
        $region46: #{tpu_custom_call.1} parent=23 // pred_check_branch
          %393 = sbr.rel (%p391) target = $region48
        $region47: #{tpu_custom_call.1} parent=23 // pred_region
          %394 = dma.done [#allocation8], 64
        $region48: #{tpu_custom_call.1} parent=23 // pred_fallthru
          _
      $region24: #{tpu_custom_call.1} parent=5 // pred_fallthru
        _
      %p395 = scmp.le.s32.totalorder 2, %s16
      // Predicated region
      $region49: #{tpu_custom_call.1} parent=5 // pred_check
        %p396 = pneg %p395
      $region50: #{tpu_custom_call.1} parent=5 // pred_check_branch
        %398 = sbr.rel (%p396) target = $region52
      $region51: #{tpu_custom_call.1} parent=5 // pred_region
        %s399 = ssub.s32 %s16, 2
        // Predicated region
        $region53: #{tpu_custom_call.1} parent=51 // pred_check
          %p400 = pneg %p71
        $region54: #{tpu_custom_call.1} parent=51 // pred_check_branch
          %402 = sbr.rel (%p400) target = $region56
        $region55: #{tpu_custom_call.1} parent=51 // pred_region
          %s403 = sand.u32 %s56, 1
          %s404 = scalar_lea.sflag [#allocation5], %s403
          %s405 = sand.u32 %s56, 1
          %s406 = smul.addr %s405, 8
          %s407 = scalar_lea.vmem [#allocation6], %s406
          %408 = dma.done %s404, 128
        $region56: #{tpu_custom_call.1} parent=51 // pred_fallthru
          _
      $region52: #{tpu_custom_call.1} parent=5 // pred_fallthru
        _
    $region6: #{tpu_custom_call.1} parent=1 // loop_footer
      %s20 = sadd.s32 1, %s16
    $region7: #{tpu_custom_call.1} parent=1 // loop_footer_branch
      %15 = sbr.rel target = $region3
    $region8: #{tpu_custom_call.1} parent=1 // loop_exit
      _
    %409 = vsyncpa [#allocation4], 1
    %s410 = scalar_lea.sflag [#allocation4], 1
    %411 = vsyncpa %s410, 1
    %412 = vsyncpa [#allocation5], 1
    %s413 = scalar_lea.sflag [#allocation5], 1
    %414 = vsyncpa %s413, 1
    %415 = vsyncpa [#allocation8], 1

</llo_original>
